<compile_context>
chip_gen: v5e
topology: v5e:2x2
jax: 0.10.0
libtpu: 0.0.40
codegen_flags: <defaults>
</compile_context>

<pallas_src>
import math

import jax
import jax.numpy as jnp
from jax import lax
from jax.experimental import pallas as pl
from jax.experimental.pallas import tpu as pltpu

_C = math.sqrt(0.9999 / 2.0)  # sqrt(0.9999) folded with the 1/2 factor


def _sqrt_volatility_kernel(t_ref, o_ref):
    t = t_ref[...].astype(jnp.float32)
    # u = t + (0.99 - t)*1e-4  ==  0.9999*t + 9.9e-5   (constants folded)
    u = 0.9999 * t + 9.9e-5
    # 2*sigma2*(1-sigma2) == 2*(sqrt(u) - u) since sigma2 = sqrt(u), so
    # out = sqrt(0.9999 / (2*(sqrt(u)-u))) = C * rsqrt(sqrt(u) - u).
    o_ref[...] = (_C * lax.rsqrt(jnp.sqrt(u) - u)).astype(o_ref.dtype)


def sqrt_volatility_ref(t: jax.Array) -> jax.Array:
    """Pure-JAX reference (mirrors the PyTorch forward exactly)."""
    sigma2 = jnp.sqrt(t + (0.99 - t) * 0.0001)
    g2 = 0.9999 / (2.0 * sigma2 * (1.0 - sigma2))
    return jnp.sqrt(g2)


def _tensorcores_per_chip() -> int:
    """Defensive TC-count probe: 2 on v7x (megacore), else 1."""
    try:
        info = pltpu.get_tpu_info()
        for attr in ("num_cores", "num_tensorcores", "tensorcores_per_chip",
                     "cores_per_chip"):
            v = getattr(info, attr, None)
            if isinstance(v, int) and v > 0:
                return v
    except Exception:
        pass
    try:
        kind = jax.devices()[0].device_kind.lower()
        if "v7" in kind:
            return 2
    except Exception:
        pass
    return 1


def sqrt_volatility(
    t: jax.Array,
    *,
    target_block_bytes: int = 4 * 1024 * 1024,
    min_pallas_elems: int = 32768,
) -> jax.Array:
    """Elementwise sqrt-volatility for any-shaped t (diffusion time values)."""
    orig_shape = t.shape
    dtype = t.dtype
    n = t.size

    # Tiny-input fallback: launch/plumbing overhead dominates, XLA fuses the
    # 4-op elementwise chain for free.
    if n == 0 or n < min_pallas_elems:
        return sqrt_volatility_ref(t)

    # --- Layout plumbing: lane-dense 2-D slab, pad only if unavoidable -------
    flat = t.reshape(-1)
    lanes = None
    for cand in (1024, 512, 256, 128):
        if n % cand == 0:
            lanes = cand
            break
    pad = 0
    if lanes is None:
        lanes = 1024 if n >= 1024 else 128
        pad = (-n) % lanes
        # Pad value 0 -> u = 9.9e-5 > 0: padded lanes compute finite junk that
        # is sliced away below.
        flat = jnp.pad(flat, (0, pad))
    rows = flat.size // lanes
    x2d = flat.reshape(rows, lanes)

    # --- Block sizing ---------------------------------------------------------
    itemsize = jnp.dtype(dtype).itemsize
    sub = max(8, 32 // max(1, itemsize))        # 8 (f32), 16 (bf16), 32 (8-bit)
    row_bytes = lanes * itemsize
    multi_tc = _tensorcores_per_chip() >= 2

    if rows <= sub:
        bm = rows                                # block == full sublane extent
    else:
        bm = min(rows, max(sub, target_block_bytes // row_bytes))
        bm = max(sub, (bm // sub) * sub)
        if multi_tc:
            # v7x: keep the "parallel" grid count EVEN so both TCs get
            # balanced work.  Never grow the block beyond the target.
            g = pl.cdiv(rows, bm)
            if g % 2 == 1:
                g_target = 2 if g == 1 else g + 1
                bm_new = pl.cdiv(rows, g_target)
                bm_new = max(sub, ((bm_new + sub - 1) // sub) * sub)
                bm = min(bm, bm_new)

    grid = (pl.cdiv(rows, bm),)

    # Live footprint = 2 buffers x (in + out) x block_bytes; pin the scoped
    # VMEM limit explicitly (>= 32 MiB, capped well under v7x's 64 MiB).
    need_bytes = 4 * bm * lanes * itemsize
    vmem_limit = int(min(max(need_bytes + (2 << 20), 32 << 20), 56 << 20))

    out2d = pl.pallas_call(
        _sqrt_volatility_kernel,
        out_shape=jax.ShapeDtypeStruct((rows, lanes), dtype),
        grid=grid,
        in_specs=[pl.BlockSpec((bm, lanes), lambda i: (i, 0))],
        out_specs=pl.BlockSpec((bm, lanes), lambda i: (i, 0)),
        compiler_params=pltpu.CompilerParams(
            dimension_semantics=("parallel",),
            vmem_limit_bytes=vmem_limit,
        ),
    )(x2d)

    out = out2d.reshape(-1)
    if pad:
        out = out[:n]
    return out.reshape(orig_shape)


if __name__ == "__main__":
    key = jax.random.PRNGKey(0)
    k1, k2, k3 = jax.random.split(key, 3)

    # Diffusion time values t in (0, 1); small, module-consistent shapes.
    t_aligned = jax.random.uniform(k1, (8, 128), dtype=jnp.float32,
                                   minval=0.01, maxval=0.95)   # 128-aligned, no pad
    t_ragged = jax.random.uniform(k2, (3, 50), dtype=jnp.float32,
                                  minval=0.01, maxval=0.95)    # exercises pad path
    t_small = jax.random.uniform(k3, (16,), dtype=jnp.float32,
                                 minval=0.01, maxval=0.95)     # fallback path

    # Force the Pallas path on the small test shapes (min_pallas_elems=0).
    for t in (t_aligned, t_ragged):
        out = jax.block_until_ready(sqrt_volatility(t, min_pallas_elems=0))
        ref = sqrt_volatility_ref(t)
        assert out.shape == ref.shape and out.dtype == ref.dtype
        assert jnp.allclose(out, ref, rtol=1e-5, atol=1e-5), "mismatch vs reference"

    # Default call: tiny-input fallback (pure JAX).
    out = jax.block_until_ready(sqrt_volatility(t_small))
    ref = sqrt_volatility_ref(t_small)
    assert jnp.allclose(out, ref, rtol=1e-5, atol=1e-5), "mismatch vs reference"

    print("KERNEL_OK")
</pallas_src>

<mosaic_0001>
module attributes {stable_mosaic.version = 11 : i64} {
  func.func @_sqrt_volatility_kernel(%arg0: i32, %arg1: memref<1x1024xf32, #tpu.memory_space<vmem>>, %arg2: memref<1x1024xf32, #tpu.memory_space<vmem>>) attributes {dimension_semantics = [#tpu.dimension_semantics<parallel>], iteration_bounds = array<i64: 1>, scalar_prefetch = 0 : i64, scratch_operands = 0 : i64, tpu.core_type = #tpu.core_type<tc>, window_params = [{transform_indices = @transform_0, window_bounds = array<i64: 1, 1024>}, {transform_indices = @transform_1, window_bounds = array<i64: 1, 1024>}]} {
    %c0 = arith.constant 0 : index
    %c0_0 = arith.constant 0 : index
    %0 = vector.load %arg1[%c0, %c0_0] : memref<1x1024xf32, #tpu.memory_space<vmem>>, vector<1x1024xf32>
    %cst = arith.constant 0.999899983 : f32
    %1 = vector.broadcast %cst : f32 to vector<1x1024xf32>
    %2 = arith.mulf %1, %0 : vector<1x1024xf32>
    %cst_1 = arith.constant 9.89999971E-5 : f32
    %3 = vector.broadcast %cst_1 : f32 to vector<1x1024xf32>
    %4 = arith.addf %2, %3 : vector<1x1024xf32>
    %5 = math.sqrt %4 : vector<1x1024xf32>
    %6 = arith.subf %5, %4 : vector<1x1024xf32>
    %7 = math.rsqrt %6 : vector<1x1024xf32>
    %cst_2 = arith.constant 0.707071424 : f32
    %8 = vector.broadcast %cst_2 : f32 to vector<1x1024xf32>
    %9 = arith.mulf %8, %7 : vector<1x1024xf32>
    %c0_3 = arith.constant 0 : index
    %c0_4 = arith.constant 0 : index
    %10 = vector.load %arg2[%c0_3, %c0_4] : memref<1x1024xf32, #tpu.memory_space<vmem>>, vector<1x1024xf32>
    tpu.vector_store %arg2[%c0_3, %c0_4], %9 {strides = array<i32>} : memref<1x1024xf32, #tpu.memory_space<vmem>>, vector<1x1024xf32>,
    return
  }
  func.func @transform_0(%arg0: i32) -> (i32, i32) {
    %c0_i32 = arith.constant 0 : i32
    %c0_i32_0 = arith.constant 0 : i32
    return %arg0, %c0_i32 : i32, i32
  }
  func.func @transform_1(%arg0: i32) -> (i32, i32) {
    %c0_i32 = arith.constant 0 : i32
    %c0_i32_0 = arith.constant 0 : i32
    return %arg0, %c0_i32 : i32, i32
  }
}

</mosaic_0001>

<llo_original>
// kernel: tpu_custom_call.1
$region0: #{tpu_custom_call.1}
  #allocation0 [shape = 'u32[]', space=smem, size = 0x4, offset = 0x4, fixed_abs, tag = 'smem constant byte address 0x4 - core index']
  #allocation1 [shape = 'u32[72,128]{1,0:T(1,128)}', space=vmem, size = 0x9000, scoped, tag = 'internal scratch']
  %s0 = inlined_call_operand.hbm [shape: f32[1,1024], index: 0, kind: input, shape index: {}]
  %s1 = inlined_call_operand.hbm [shape: f32[1,1024], index: 1, kind: output, shape index: {}]
  %s2 = sld [smem:[#allocation0]]
  $region18: #{tpu_custom_call.1} parent=0
    _
  %s4 = ssub.s32 1, %s2
  %s5 = scalar_select 0, %s4, %s2
  $region1: #{tpu_custom_call.1} parent=0
    #allocation2 [shape = 'u8[4096]{0}', space=vmem, size = 0x1000, scoped, tag = 'input window, operand 0, single buffered']
    #allocation3 [shape = 's32[1]{0}', space=sflag, size = 0x4, scoped, tag = 'scoped memory for tpu_custom_call.1']
    #allocation4 [shape = 's32[1]{0}', space=sflag, size = 0x4, scoped, tag = 'scoped memory for tpu_custom_call.1']
    #allocation5 [shape = 'u8[4096]{0}', space=vmem, size = 0x1000, scoped, tag = 'output window, operand 0, single buffered']
    %6 = vsyncpa [#allocation3], 0
    %7 = vsyncpa [#allocation4], 0
    // Predicated region
    $region2: #{tpu_custom_call.1} parent=1 // pred_check
      _
    $region3: #{tpu_custom_call.1} parent=1 // pred_check_branch
      %9 = sbr.rel (0) target = $region5
    $region4: #{tpu_custom_call.1} parent=1 // pred_region
      %11 = vsyncadd [#allocation3], 0
      %s13 = sshll.u32 %s0, 4
      %s14 = int_to_ptr.hbm [resolvable:$true] %s13
      %s15 = sshll.u32 [#allocation2], 4
      %s16 = int_to_ptr.vmem [resolvable:$true] %s15
      %18 = dma.hbm_to_vmem [thread:$0]  %s14, 128, %s16, [#allocation3]
    $region5: #{tpu_custom_call.1} parent=1 // pred_fallthru
      _
    // Predicated region
    $region6: #{tpu_custom_call.1} parent=1 // pred_check
      _
    $region7: #{tpu_custom_call.1} parent=1 // pred_check_branch
      %20 = sbr.rel (0) target = $region9
    $region8: #{tpu_custom_call.1} parent=1 // pred_region
      %22 = dma.done [#allocation3], 128
    $region9: #{tpu_custom_call.1} parent=1 // pred_fallthru
      _
    %v23 = vld [vmem:[#allocation2] sm:$0xff]
    %v24 = vmul.f32 %v23, 0.9999
    %v25 = vadd.f32 %v24, 9.9e-05
    %v26 = vrsqrt.pop %v25
    %v27 = vmul.f32 %v26, %v25
    %v28 = vmul.f32 %v27, %v26
    %v29 = vmul.f32 0.5, %v28
    %v30 = vsub.f32 1.5, %v29
    %v31 = vmul.f32 %v26, %v30
    %v32 = vmul.f32 %v25, %v31
    %vm33 = vcmp.eq.f32.partialorder %v25, inf
    %v34 = vsel %vm33, %v25, %v32
    %vm35 = vcmp.eq.f32.partialorder %v25, 0.0
    %v36 = vand.u32 %v25, 2147483648
    %v37 = vsel %vm35, %v36, %v34
    %v38 = vsub.f32 %v37, %v25
    %v39 = vrsqrt.pop %v38
    %v40 = vmul.f32 %v39, %v38
    %v41 = vmul.f32 %v40, %v39
    %v42 = vmul.f32 0.5, %v41
    %v43 = vsub.f32 1.5, %v42
    %v44 = vmul.f32 %v39, %v43
    %vm45 = vweird.f32 %v38
    %vm46 = vweird.f32 %v39
    %vm47 = vmor %vm45, %vm46
    %v48 = vsel %vm47, %v39, %v44
    %v49 = vmul.f32 %v48, 0.7070714
    %50 = vst [vmem:[#allocation5] sm:$0xff] %v49
    // Predicated region
    $region10: #{tpu_custom_call.1} parent=1 // pred_check
      _
    $region11: #{tpu_custom_call.1} parent=1 // pred_check_branch
      %52 = sbr.rel (0) target = $region13
    $region12: #{tpu_custom_call.1} parent=1 // pred_region
      %54 = vsyncadd [#allocation4], 0
      %s56 = sshll.u32 [#allocation5], 4
      %s57 = int_to_ptr.vmem [resolvable:$true] %s56
      %s58 = sshll.u32 %s1, 4
      %s59 = int_to_ptr.hbm [resolvable:$true] %s58
      %61 = dma.vmem_to_hbm [thread:$0]  %s57, 128, %s59, [#allocation4]
    $region13: #{tpu_custom_call.1} parent=1 // pred_fallthru
      _
    // Predicated region
    $region14: #{tpu_custom_call.1} parent=1 // pred_check
      _
    $region15: #{tpu_custom_call.1} parent=1 // pred_check_branch
      %63 = sbr.rel (0) target = $region17
    $region16: #{tpu_custom_call.1} parent=1 // pred_region
      %65 = dma.done [#allocation4], 128
    $region17: #{tpu_custom_call.1} parent=1 // pred_fallthru
      _
    %66 = vsyncpa [#allocation3], 1
    %67 = vsyncpa [#allocation4], 1

</llo_original>
